<compile_context>
chip_gen: v7x
topology: tpu7x:2x2x1
jax: 0.10.0
libtpu: 0.0.40
codegen_flags: <defaults>
</compile_context>

<pallas_src>
import jax
import jax.numpy as jnp
from jax import lax
from jax.experimental import pallas as pl
from jax.experimental.pallas import tpu as pltpu


# ---------------------------------------------------------------------------
# Counter-based hash PRNG (int32-only ops; lowers on TPU and in interpret mode)
# ---------------------------------------------------------------------------
def _i32(v):
    """Python int -> equivalent signed-int32 Python int (two's complement)."""
    v &= 0xFFFFFFFF
    return v - (1 << 32) if v >= (1 << 31) else v


_C_MUL1 = _i32(0x7FEB352D)      # lowbias32 finalizer constants
_C_MUL2 = _i32(0x846CA68B)
_C_ROW = _i32(0x9E3779B1)       # distinct odd multipliers for (row, col, seed)
_C_COL = _i32(0x85EBCA77)
_C_SEED = _i32(0x27D4EB2F)
_C_STREAM_S = _i32(0x1B873593)  # independent streams for scalar / vector paths
_C_STREAM_V = _i32(0xCC9E2D51)


def _lsr(x, k):
    """Logical right shift for int32 (arithmetic shift + mask off sign bits)."""
    return jnp.bitwise_and(jnp.right_shift(x, k), (1 << (32 - k)) - 1)


def _mix32(x):
    """lowbias32 avalanche mixer; bit-identical to the uint32 reference."""
    x = jnp.bitwise_xor(x, _lsr(x, 16))
    x = x * _C_MUL1
    x = jnp.bitwise_xor(x, _lsr(x, 15))
    x = x * _C_MUL2
    x = jnp.bitwise_xor(x, _lsr(x, 16))
    return x


def _bits24(row, col, key):
    """Well-mixed 24-bit value in [0, 2^24) per (row, col, key)."""
    h = row * _C_ROW + col * _C_COL + key
    return jnp.bitwise_and(_mix32(h), 0x00FFFFFF)


def _threshold(keep_prob):
    return min(1 << 24, max(0, int(round(keep_prob * float(1 << 24)))))


# ---------------------------------------------------------------------------
# Kernels (drop_rate baked in as a compile-time constant)
# ---------------------------------------------------------------------------
def _make_sv_kernel(drop_rate):
    keep_prob = 1.0 - float(drop_rate)
    inv_keep = float(1.0 / keep_prob)
    thresh = _threshold(keep_prob)

    def kernel(seed_ref, s_ref, v_ref, so_ref, vo_ref):
        tile = s_ref.shape[0]
        row0 = pl.program_id(0) * tile
        key = _mix32(seed_ref[0] * _C_SEED)          # non-additive seed mixing

        # --- scalar channels: nn.Dropout, independent mask per element -------
        cs = s_ref.shape[1]
        srow = lax.broadcasted_iota(jnp.int32, (tile, cs), 0) + row0
        scol = lax.broadcasted_iota(jnp.int32, (tile, cs), 1)
        sbits = _bits24(srow, scol, key + _C_STREAM_S)
        s_scale = jnp.where(sbits < thresh, jnp.float32(inv_keep), jnp.float32(0.0))
        so_ref[...] = (s_ref[...].astype(jnp.float32) * s_scale).astype(so_ref.dtype)

        # --- vector channels: _VDropout, one mask per (row, channel), ---------
        # --- shared across the xyz axis (channel index = lane // 3) -----------
        cv3 = v_ref.shape[1]
        vrow = lax.broadcasted_iota(jnp.int32, (tile, cv3), 0) + row0
        vlane = lax.broadcasted_iota(jnp.int32, (tile, cv3), 1)
        vchan = jnp.right_shift(vlane * 21846, 16)   # exact lane // 3 for lane < 32768
        vbits = _bits24(vrow, vchan, key + _C_STREAM_V)
        v_scale = jnp.where(vbits < thresh, jnp.float32(inv_keep), jnp.float32(0.0))
        vo_ref[...] = (v_ref[...].astype(jnp.float32) * v_scale).astype(vo_ref.dtype)

    return kernel


def _make_s_kernel(drop_rate):
    keep_prob = 1.0 - float(drop_rate)
    inv_keep = float(1.0 / keep_prob)
    thresh = _threshold(keep_prob)

    def kernel(seed_ref, s_ref, so_ref):
        tile, cs = s_ref.shape
        row0 = pl.program_id(0) * tile
        key = _mix32(seed_ref[0] * _C_SEED)
        srow = lax.broadcasted_iota(jnp.int32, (tile, cs), 0) + row0
        scol = lax.broadcasted_iota(jnp.int32, (tile, cs), 1)
        sbits = _bits24(srow, scol, key + _C_STREAM_S)
        s_scale = jnp.where(sbits < thresh, jnp.float32(inv_keep), jnp.float32(0.0))
        so_ref[...] = (s_ref[...].astype(jnp.float32) * s_scale).astype(so_ref.dtype)

    return kernel


# ---------------------------------------------------------------------------
# Wrappers
# ---------------------------------------------------------------------------
def _cdiv(a, b):
    return -(-a // b)


def _row_count(dims):
    rows = 1
    for d in dims:
        rows *= d
    return rows


def _auto_tile(rows, bytes_per_row, tile_rows=None, budget_bytes=12 * 1024 * 1024):
    """Row tile: multiple of 8, double-buffered working set under budget_bytes,
    >= ~8 grid steps when rows allow (v7x megacore + pipeline depth)."""
    if rows < 8:
        return rows                       # full-extent block (allowed exemption)
    if tile_rows is not None:
        t = min(int(tile_rows), rows)
    else:
        t = min(budget_bytes // max(1, bytes_per_row), rows)
        t = min(t, max(512, _cdiv(rows, 8)))
    return max(8, (t // 8) * 8)


_COMPILER_PARAMS = pltpu.CompilerParams(
    dimension_semantics=("parallel",),
    vmem_limit_bytes=32 * 1024 * 1024,
)


def _sv_dropout(s, v, drop_rate, seed, tile_rows):
    s_shape, v_shape = s.shape, v.shape
    assert v_shape[-1] == 3, "vector features must end with an xyz axis of size 3"
    cs, cv = s_shape[-1], v_shape[-2]
    rows = _row_count(s_shape[:-1])
    assert rows == _row_count(v_shape[:-2]), "s and v must share leading dims"

    # Free reshapes only: no transpose, no dtype cast, no padding.
    s2 = s.reshape(rows, cs)
    v2 = v.reshape(rows, cv * 3)

    bytes_per_row = (cs * s.dtype.itemsize + cv * 3 * v.dtype.itemsize) * 4
    tile = _auto_tile(rows, bytes_per_row, tile_rows)
    grid = (_cdiv(rows, tile),)

    seed_arr = jnp.reshape(jnp.asarray(seed, dtype=jnp.int32), (1,))
    nbytes = 2 * (s2.size * s.dtype.itemsize + v2.size * v.dtype.itemsize) + 4
    cost = pl.CostEstimate(flops=2 * (s2.size + v2.size), transcendentals=0,
                           bytes_accessed=nbytes)

    so, vo = pl.pallas_call(
        _make_sv_kernel(drop_rate),
        out_shape=(jax.ShapeDtypeStruct((rows, cs), s.dtype),
                   jax.ShapeDtypeStruct((rows, cv * 3), v.dtype)),
        grid_spec=pltpu.PrefetchScalarGridSpec(
            num_scalar_prefetch=1,
            grid=grid,
            in_specs=[pl.BlockSpec((tile, cs), lambda i, seed: (i, 0)),
                      pl.BlockSpec((tile, cv * 3), lambda i, seed: (i, 0))],
            out_specs=[pl.BlockSpec((tile, cs), lambda i, seed: (i, 0)),
                       pl.BlockSpec((tile, cv * 3), lambda i, seed: (i, 0))]),
        compiler_params=_COMPILER_PARAMS,
        cost_estimate=cost,
    )(seed_arr, s2, v2)

    return so.reshape(s_shape), vo.reshape(v_shape)


def _s_dropout(s, drop_rate, seed, tile_rows):
    s_shape = s.shape
    cs = s_shape[-1]
    rows = _row_count(s_shape[:-1])

    s2 = s.reshape(rows, cs)
    bytes_per_row = cs * s.dtype.itemsize * 4
    tile = _auto_tile(rows, bytes_per_row, tile_rows)
    grid = (_cdiv(rows, tile),)

    seed_arr = jnp.reshape(jnp.asarray(seed, dtype=jnp.int32), (1,))
    cost = pl.CostEstimate(flops=2 * s2.size, transcendentals=0,
                           bytes_accessed=2 * s2.size * s.dtype.itemsize + 4)

    so = pl.pallas_call(
        _make_s_kernel(drop_rate),
        out_shape=jax.ShapeDtypeStruct((rows, cs), s.dtype),
        grid_spec=pltpu.PrefetchScalarGridSpec(
            num_scalar_prefetch=1,
            grid=grid,
            in_specs=[pl.BlockSpec((tile, cs), lambda i, seed: (i, 0))],
            out_specs=pl.BlockSpec((tile, cs), lambda i, seed: (i, 0))),
        compiler_params=_COMPILER_PARAMS,
        cost_estimate=cost,
    )(seed_arr, s2)

    return so.reshape(s_shape)


def dropout_forward(x, drop_rate, seed=0, training=True, tile_rows=None):
    """Pallas port of protfill Dropout.forward.

    x: either a single scalar-channel array (-> nn.Dropout only), or a tuple
       (s, v) where v has a trailing xyz axis of size 3 (GVP vector channels).
    """
    drop_rate = float(drop_rate)
    if isinstance(x, (tuple, list)):
        s, v = x
        if (not training) or drop_rate == 0.0:
            return s, v
        if drop_rate >= 1.0:
            return jnp.zeros_like(s), jnp.zeros_like(v)
        return _sv_dropout(s, v, drop_rate, seed, tile_rows)
    if (not training) or drop_rate == 0.0:
        return x
    if drop_rate >= 1.0:
        return jnp.zeros_like(x)
    return _s_dropout(x, drop_rate, seed, tile_rows)


# ---------------------------------------------------------------------------
# Demo / self-check
# ---------------------------------------------------------------------------
if __name__ == "__main__":
    B, N, Cs, Cv = 2, 16, 128, 16
    drop_rate = 0.25
    keep = 1.0 - drop_rate

    key = jax.random.PRNGKey(0)
    ks, kv = jax.random.split(key)
    s = jax.random.normal(ks, (B, N, Cs), jnp.float32)
    v = jax.random.normal(kv, (B, N, Cv, 3), jnp.float32)

    # multi-step pipelined grid path: tile_rows=8 -> 4 grid steps over 32 rows
    fwd = jax.jit(lambda s, v, seed: dropout_forward(
        (s, v), drop_rate, seed, training=True, tile_rows=8))
    so, vo = fwd(s, v, 0)
    jax.block_until_ready((so, vo))

    assert so.shape == s.shape and vo.shape == v.shape
    assert so.dtype == s.dtype and vo.dtype == v.dtype

    # scalar dropout: entries are either 0 or s/(1-p); drop fraction ~ p
    dropped = (so == 0.0)
    frac = float(jnp.mean(dropped.astype(jnp.float32)))
    assert abs(frac - drop_rate) < 0.1, f"scalar drop fraction {frac}"
    err = float(jnp.max(jnp.abs(jnp.where(dropped, 0.0, so - s / keep))))
    assert err < 1e-5, f"scalar scale error {err}"

    # vector dropout: xyz components of each channel are dropped together
    vz = (vo == 0.0)
    all_z = jnp.all(vz, axis=-1)
    any_z = jnp.any(vz, axis=-1)
    assert bool(jnp.all(all_z == any_z)), "xyz components not dropped jointly"
    verr = float(jnp.max(jnp.abs(jnp.where(vz, 0.0, vo - v / keep))))
    assert verr < 1e-5, f"vector scale error {verr}"
    vfrac = float(jnp.mean(all_z.astype(jnp.float32)))
    assert abs(vfrac - drop_rate) < 0.1, f"vector drop fraction {vfrac}"

    # default auto-tiled path, and native bf16 I/O path (no wrapper upcast)
    so2, vo2 = jax.jit(lambda s, v: dropout_forward((s, v), drop_rate, 3))(s, v)
    jax.block_until_ready((so2, vo2))
    sb = s.astype(jnp.bfloat16)
    sb_out = jax.jit(lambda x: dropout_forward(x, drop_rate, seed=7))(sb)
    jax.block_until_ready(sb_out)
    assert sb_out.shape == s.shape and sb_out.dtype == jnp.bfloat16

    # eval mode: identity
    se, ve = dropout_forward((s, v), drop_rate, 0, training=False)
    assert bool(jnp.all(se == s)) and bool(jnp.all(ve == v))

    print("KERNEL_OK")
</pallas_src>

<mosaic_0001>
module attributes {stable_mosaic.version = 11 : i64} {
  func.func @kernel(%arg0: i32, %arg1: memref<1xi32, #tpu.memory_space<smem>>, %arg2: memref<8x128xf32, #tpu.memory_space<vmem>>, %arg3: memref<8x48xf32, #tpu.memory_space<vmem>>, %arg4: memref<8x128xf32, #tpu.memory_space<vmem>>, %arg5: memref<8x48xf32, #tpu.memory_space<vmem>>) attributes {dimension_semantics = [#tpu.dimension_semantics<parallel>], iteration_bounds = array<i64: 4>, scalar_prefetch = 1 : i64, scratch_operands = 0 : i64, tpu.core_type = #tpu.core_type<tc>, window_params = [{transform_indices = @transform_0, window_bounds = array<i64: 8, 128>}, {transform_indices = @transform_1, window_bounds = array<i64: 8, 48>}, {transform_indices = @transform_2, window_bounds = array<i64: 8, 128>}, {transform_indices = @transform_3, window_bounds = array<i64: 8, 48>}]} {
    %c8_i32 = arith.constant 8 : i32
    %0 = arith.muli %arg0, %c8_i32 : i32
    %c0 = arith.constant 0 : index
    %1 = memref.load %arg1[%c0] : memref<1xi32, #tpu.memory_space<smem>>
    %c668265263_i32 = arith.constant 668265263 : i32
    %2 = arith.muli %1, %c668265263_i32 : i32
    %c16_i32 = arith.constant 16 : i32
    %3 = arith.shrsi %2, %c16_i32 : i32
    %c65535_i32 = arith.constant 65535 : i32
    %4 = arith.andi %3, %c65535_i32 : i32
    %5 = arith.xori %2, %4 : i32
    %c2146121005_i32 = arith.constant 2146121005 : i32
    %6 = arith.muli %5, %c2146121005_i32 : i32
    %c15_i32 = arith.constant 15 : i32
    %7 = arith.shrsi %6, %c15_i32 : i32
    %c131071_i32 = arith.constant 131071 : i32
    %8 = arith.andi %7, %c131071_i32 : i32
    %9 = arith.xori %6, %8 : i32
    %c-2073254261_i32 = arith.constant -2073254261 : i32
    %10 = arith.muli %9, %c-2073254261_i32 : i32
    %c16_i32_0 = arith.constant 16 : i32
    %11 = arith.shrsi %10, %c16_i32_0 : i32
    %c65535_i32_1 = arith.constant 65535 : i32
    %12 = arith.andi %11, %c65535_i32_1 : i32
    %13 = arith.xori %10, %12 : i32
    %14 = tpu.iota {dimensions = array<i32: 0>} : vector<8x128xi32>
    %15 = vector.broadcast %0 : i32 to vector<8x128xi32>
    %16 = arith.addi %14, %15 : vector<8x128xi32>
    %17 = tpu.iota {dimensions = array<i32: 1>} : vector<8x128xi32>
    %c461845907_i32 = arith.constant 461845907 : i32
    %18 = arith.addi %13, %c461845907_i32 : i32
    %c-1640531535_i32 = arith.constant -1640531535 : i32
    %19 = vector.broadcast %c-1640531535_i32 : i32 to vector<8x128xi32>
    %20 = arith.muli %16, %19 : vector<8x128xi32>
    %c-2048144777_i32 = arith.constant -2048144777 : i32
    %21 = vector.broadcast %c-2048144777_i32 : i32 to vector<8x128xi32>
    %22 = arith.muli %17, %21 : vector<8x128xi32>
    %23 = arith.addi %20, %22 : vector<8x128xi32>
    %24 = vector.broadcast %18 : i32 to vector<8x128xi32>
    %25 = arith.addi %23, %24 : vector<8x128xi32>
    %c16_i32_2 = arith.constant 16 : i32
    %26 = vector.broadcast %c16_i32_2 : i32 to vector<8x128xi32>
    %27 = arith.shrsi %25, %26 : vector<8x128xi32>
    %c65535_i32_3 = arith.constant 65535 : i32
    %28 = vector.broadcast %c65535_i32_3 : i32 to vector<8x128xi32>
    %29 = arith.andi %27, %28 : vector<8x128xi32>
    %30 = arith.xori %25, %29 : vector<8x128xi32>
    %c2146121005_i32_4 = arith.constant 2146121005 : i32
    %31 = vector.broadcast %c2146121005_i32_4 : i32 to vector<8x128xi32>
    %32 = arith.muli %30, %31 : vector<8x128xi32>
    %c15_i32_5 = arith.constant 15 : i32
    %33 = vector.broadcast %c15_i32_5 : i32 to vector<8x128xi32>
    %34 = arith.shrsi %32, %33 : vector<8x128xi32>
    %c131071_i32_6 = arith.constant 131071 : i32
    %35 = vector.broadcast %c131071_i32_6 : i32 to vector<8x128xi32>
    %36 = arith.andi %34, %35 : vector<8x128xi32>
    %37 = arith.xori %32, %36 : vector<8x128xi32>
    %c-2073254261_i32_7 = arith.constant -2073254261 : i32
    %38 = vector.broadcast %c-2073254261_i32_7 : i32 to vector<8x128xi32>
    %39 = arith.muli %37, %38 : vector<8x128xi32>
    %c16_i32_8 = arith.constant 16 : i32
    %40 = vector.broadcast %c16_i32_8 : i32 to vector<8x128xi32>
    %41 = arith.shrsi %39, %40 : vector<8x128xi32>
    %c65535_i32_9 = arith.constant 65535 : i32
    %42 = vector.broadcast %c65535_i32_9 : i32 to vector<8x128xi32>
    %43 = arith.andi %41, %42 : vector<8x128xi32>
    %44 = arith.xori %39, %43 : vector<8x128xi32>
    %c16777215_i32 = arith.constant 16777215 : i32
    %45 = vector.broadcast %c16777215_i32 : i32 to vector<8x128xi32>
    %46 = arith.andi %44, %45 : vector<8x128xi32>
    %c12582912_i32 = arith.constant 12582912 : i32
    %47 = vector.broadcast %c12582912_i32 : i32 to vector<8x128xi32>
    %48 = arith.cmpi slt, %46, %47 : vector<8x128xi32>
    %cst = arith.constant 1.33333337 : f32
    %cst_10 = arith.constant 0.000000e+00 : f32
    %49 = vector.broadcast %cst : f32 to vector<8x128xf32>
    %50 = vector.broadcast %cst_10 : f32 to vector<8x128xf32>
    %51 = arith.select %48, %49, %50 : vector<8x128xi1>, vector<8x128xf32>
    %c0_11 = arith.constant 0 : index
    %c0_12 = arith.constant 0 : index
    %52 = vector.load %arg2[%c0_11, %c0_12] : memref<8x128xf32, #tpu.memory_space<vmem>>, vector<8x128xf32>
    %53 = arith.mulf %52, %51 : vector<8x128xf32>
    %c0_13 = arith.constant 0 : index
    %c0_14 = arith.constant 0 : index
    %54 = vector.load %arg4[%c0_13, %c0_14] : memref<8x128xf32, #tpu.memory_space<vmem>>, vector<8x128xf32>
    tpu.vector_store %arg4[%c0_13, %c0_14], %53 {strides = array<i32>} : memref<8x128xf32, #tpu.memory_space<vmem>>, vector<8x128xf32>,
    %55 = tpu.iota {dimensions = array<i32: 0>} : vector<8x48xi32>
    %56 = vector.broadcast %0 : i32 to vector<8x48xi32>
    %57 = arith.addi %55, %56 : vector<8x48xi32>
    %58 = tpu.iota {dimensions = array<i32: 1>} : vector<8x48xi32>
    %c21846_i32 = arith.constant 21846 : i32
    %59 = vector.broadcast %c21846_i32 : i32 to vector<8x48xi32>
    %60 = arith.muli %58, %59 : vector<8x48xi32>
    %c16_i32_15 = arith.constant 16 : i32
    %61 = vector.broadcast %c16_i32_15 : i32 to vector<8x48xi32>
    %62 = arith.shrsi %60, %61 : vector<8x48xi32>
    %c-862048943_i32 = arith.constant -862048943 : i32
    %63 = arith.addi %13, %c-862048943_i32 : i32
    %c-1640531535_i32_16 = arith.constant -1640531535 : i32
    %64 = vector.broadcast %c-1640531535_i32_16 : i32 to vector<8x48xi32>
    %65 = arith.muli %57, %64 : vector<8x48xi32>
    %c-2048144777_i32_17 = arith.constant -2048144777 : i32
    %66 = vector.broadcast %c-2048144777_i32_17 : i32 to vector<8x48xi32>
    %67 = arith.muli %62, %66 : vector<8x48xi32>
    %68 = arith.addi %65, %67 : vector<8x48xi32>
    %69 = vector.broadcast %63 : i32 to vector<8x48xi32>
    %70 = arith.addi %68, %69 : vector<8x48xi32>
    %c16_i32_18 = arith.constant 16 : i32
    %71 = vector.broadcast %c16_i32_18 : i32 to vector<8x48xi32>
    %72 = arith.shrsi %70, %71 : vector<8x48xi32>
    %c65535_i32_19 = arith.constant 65535 : i32
    %73 = vector.broadcast %c65535_i32_19 : i32 to vector<8x48xi32>
    %74 = arith.andi %72, %73 : vector<8x48xi32>
    %75 = arith.xori %70, %74 : vector<8x48xi32>
    %c2146121005_i32_20 = arith.constant 2146121005 : i32
    %76 = vector.broadcast %c2146121005_i32_20 : i32 to vector<8x48xi32>
    %77 = arith.muli %75, %76 : vector<8x48xi32>
    %c15_i32_21 = arith.constant 15 : i32
    %78 = vector.broadcast %c15_i32_21 : i32 to vector<8x48xi32>
    %79 = arith.shrsi %77, %78 : vector<8x48xi32>
    %c131071_i32_22 = arith.constant 131071 : i32
    %80 = vector.broadcast %c131071_i32_22 : i32 to vector<8x48xi32>
    %81 = arith.andi %79, %80 : vector<8x48xi32>
    %82 = arith.xori %77, %81 : vector<8x48xi32>
    %c-2073254261_i32_23 = arith.constant -2073254261 : i32
    %83 = vector.broadcast %c-2073254261_i32_23 : i32 to vector<8x48xi32>
    %84 = arith.muli %82, %83 : vector<8x48xi32>
    %c16_i32_24 = arith.constant 16 : i32
    %85 = vector.broadcast %c16_i32_24 : i32 to vector<8x48xi32>
    %86 = arith.shrsi %84, %85 : vector<8x48xi32>
    %c65535_i32_25 = arith.constant 65535 : i32
    %87 = vector.broadcast %c65535_i32_25 : i32 to vector<8x48xi32>
    %88 = arith.andi %86, %87 : vector<8x48xi32>
    %89 = arith.xori %84, %88 : vector<8x48xi32>
    %c16777215_i32_26 = arith.constant 16777215 : i32
    %90 = vector.broadcast %c16777215_i32_26 : i32 to vector<8x48xi32>
    %91 = arith.andi %89, %90 : vector<8x48xi32>
    %c12582912_i32_27 = arith.constant 12582912 : i32
    %92 = vector.broadcast %c12582912_i32_27 : i32 to vector<8x48xi32>
    %93 = arith.cmpi slt, %91, %92 : vector<8x48xi32>
    %cst_28 = arith.constant 1.33333337 : f32
    %cst_29 = arith.constant 0.000000e+00 : f32
    %94 = vector.broadcast %cst_28 : f32 to vector<8x48xf32>
    %95 = vector.broadcast %cst_29 : f32 to vector<8x48xf32>
    %96 = arith.select %93, %94, %95 : vector<8x48xi1>, vector<8x48xf32>
    %c0_30 = arith.constant 0 : index
    %c0_31 = arith.constant 0 : index
    %97 = vector.load %arg3[%c0_30, %c0_31] : memref<8x48xf32, #tpu.memory_space<vmem>>, vector<8x48xf32>
    %98 = arith.mulf %97, %96 : vector<8x48xf32>
    %c0_32 = arith.constant 0 : index
    %c0_33 = arith.constant 0 : index
    %99 = vector.load %arg5[%c0_32, %c0_33] : memref<8x48xf32, #tpu.memory_space<vmem>>, vector<8x48xf32>
    tpu.vector_store %arg5[%c0_32, %c0_33], %98 {strides = array<i32>} : memref<8x48xf32, #tpu.memory_space<vmem>>, vector<8x48xf32>,
    return
  }
  func.func @transform_0(%arg0: i32, %arg1: memref<1xi32, #tpu.memory_space<smem>>) -> (i32, i32) {
    %c0_i32 = arith.constant 0 : i32
    %c0_i32_0 = arith.constant 0 : i32
    return %arg0, %c0_i32 : i32, i32
  }
  func.func @transform_1(%arg0: i32, %arg1: memref<1xi32, #tpu.memory_space<smem>>) -> (i32, i32) {
    %c0_i32 = arith.constant 0 : i32
    %c0_i32_0 = arith.constant 0 : i32
    return %arg0, %c0_i32 : i32, i32
  }
  func.func @transform_2(%arg0: i32, %arg1: memref<1xi32, #tpu.memory_space<smem>>) -> (i32, i32) {
    %c0_i32 = arith.constant 0 : i32
    %c0_i32_0 = arith.constant 0 : i32
    return %arg0, %c0_i32 : i32, i32
  }
  func.func @transform_3(%arg0: i32, %arg1: memref<1xi32, #tpu.memory_space<smem>>) -> (i32, i32) {
    %c0_i32 = arith.constant 0 : i32
    %c0_i32_0 = arith.constant 0 : i32
    return %arg0, %c0_i32 : i32, i32
  }
}

</mosaic_0001>

<llo_original>
// kernel: _lambda_.1
$region0: #{_lambda_.1}
  #allocation0 [shape = 'u32[]', space=smem, size = 0x4, offset = 0x4, fixed_abs, tag = 'smem constant byte address 0x4 - core index']
  #allocation1 [shape = 'u32[144,128]{1,0:T(1,128)}', space=vmem, size = 0x12000, scoped, tag = 'internal scratch']
  #allocation2 [shape = 's32[1]{0}', space=sflag, size = 0x4, scoped, tag = 'scoped memory for _lambda_.1']
  #allocation3 [shape = 's32[1]{0:T(128)S(6)}', space=smem, size = 0x200, scoped, tag = 'prefetched SMEM operand 0']
  %s0 = inlined_call_operand.<no memory space> [shape: s32[1], index: 0, kind: input, shape index: {}]
  %s1 = inlined_call_operand.vmem [shape: f32[32,128], index: 1, kind: input, shape index: {}]
  %s2 = inlined_call_operand.vmem [shape: f32[32,48], index: 2, kind: input, shape index: {}]
  %s3 = inlined_call_operand.hbm [shape: f32[32,128], index: 3, kind: output, shape index: {0}]
  %s4 = inlined_call_operand.vmem [shape: f32[32,48], index: 4, kind: output, shape index: {1}]
  %5 = xla_tuple %s3, %s4
  %s6 = sld [smem:[#allocation0]]
  $region49: #{_lambda_.1} parent=0
    _
  %s8 = ssub.s32 1, %s6
  %s9 = scalar_select 0, %s8, %s6
  %10 = sst [smem:[#allocation3]] %s0
  $region1: #{_lambda_.1} parent=0
    #allocation4 [shape = 'u8[8192]{0}', space=vmem, size = 0x2000, scoped, tag = 'output window, operand 0']
    #allocation5 [shape = 's32[2]{0}', space=sflag, size = 0x8, scoped, tag = 'scoped memory for _lambda_.1']
    %11 = vsyncpa [#allocation5], 0
    %s12 = scalar_lea.sflag [#allocation5], 1
    %13 = vsyncpa %s12, 0
    loop: start=0, step=1, limit=6
    $region2: #{_lambda_.1} parent=1 // loop_pre_header
      _
    $region3: #{_lambda_.1} parent=1 // loop_header
      %s15 = sphi 0, %s19
      %p16 = scmp.ge.s32.totalorder %s15, 6
      %s25 = sphi 0, %s27
      %s28 = sphi 0, %s25
      %s29 = sphi 0, %s28
      %s45 = sphi 0, %s29
      %s51 = sphi 0, %s53
      %s54 = sphi 0, %s51
      %s55 = sphi 0, %s54
      %s71 = sphi 0, %s55
      %s77 = sphi 0, %s79
      %s80 = sphi 0, %s77
      %s81 = sphi 0, %s80
      %s97 = sphi 0, %s81
      %s103 = sphi 0, %s105
      %s106 = sphi 0, %s103
      %s107 = sphi 0, %s106
      %s123 = sphi 0, %s107
    $region4: #{_lambda_.1} parent=1 // loop_header_branch
      %18 = sbr.rel (%p16) target = $region8
    $region5: #{_lambda_.1} parent=1 // loop_body
      %s20 = ssub.s32 %s15, 1
      %s21 = ssub.s32 %s15, 2
      %s22 = sadd.s32 %s15, 1
      %s23 = ssub.s32 %s15, %s22
      %p24 = scmp.eq.s32.totalorder %s23, 0
      %s26 = sadd.s32 %s25, 1
      %s27 = scalar_select %p24, %s25, %s26
      %p30 = pneg %p24
      %p31 = scmp.eq.s32.totalorder %s15, 3
      %p32 = por %p30, %p31
      %p33 = scmp.ne.s32.totalorder %s25, %s28
      %p34 = scmp.eq.s32.totalorder %s15, 0
      %p35 = por %p33, %p34
      %p36 = scmp.ne.s32.totalorder %s25, %s28
      %p37 = scmp.eq.s32.totalorder %s20, 3
      %p38 = por %p36, %p37
      %p39 = scmp.ne.s32.totalorder %s28, %s29
      %p40 = scmp.eq.s32.totalorder %s20, 0
      %p41 = por %p39, %p40
      %p42 = scmp.ne.s32.totalorder %s28, %s29
      %p43 = scmp.eq.s32.totalorder %s21, 3
      %p44 = por %p42, %p43
      %p46 = scmp.ne.s32.totalorder %s29, %s45
      %p47 = scmp.eq.s32.totalorder %s21, 0
      %p48 = por %p46, %p47
      %s49 = ssub.s32 %s15, %s22
      %p50 = scmp.eq.s32.totalorder %s49, 0
      %s52 = sadd.s32 %s51, 1
      %s53 = scalar_select %p50, %s51, %s52
      %p56 = pneg %p50
      %p57 = scmp.eq.s32.totalorder %s15, 3
      %p58 = por %p56, %p57
      %p59 = scmp.ne.s32.totalorder %s51, %s54
      %p60 = scmp.eq.s32.totalorder %s15, 0
      %p61 = por %p59, %p60
      %p62 = scmp.ne.s32.totalorder %s51, %s54
      %p63 = scmp.eq.s32.totalorder %s20, 3
      %p64 = por %p62, %p63
      %p65 = scmp.ne.s32.totalorder %s54, %s55
      %p66 = scmp.eq.s32.totalorder %s20, 0
      %p67 = por %p65, %p66
      %p68 = scmp.ne.s32.totalorder %s54, %s55
      %p69 = scmp.eq.s32.totalorder %s21, 3
      %p70 = por %p68, %p69
      %p72 = scmp.ne.s32.totalorder %s55, %s71
      %p73 = scmp.eq.s32.totalorder %s21, 0
      %p74 = por %p72, %p73
      %s75 = ssub.s32 %s15, %s22
      %p76 = scmp.eq.s32.totalorder %s75, 0
      %s78 = sadd.s32 %s77, 1
      %s79 = scalar_select %p76, %s77, %s78
      %p82 = pneg %p76
      %p83 = scmp.eq.s32.totalorder %s15, 3
      %p84 = por %p82, %p83
      %p85 = scmp.ne.s32.totalorder %s77, %s80
      %p86 = scmp.eq.s32.totalorder %s15, 0
      %p87 = por %p85, %p86
      %p88 = scmp.ne.s32.totalorder %s77, %s80
      %p89 = scmp.eq.s32.totalorder %s20, 3
      %p90 = por %p88, %p89
      %p91 = scmp.ne.s32.totalorder %s80, %s81
      %p92 = scmp.eq.s32.totalorder %s20, 0
      %p93 = por %p91, %p92
      %p94 = scmp.ne.s32.totalorder %s80, %s81
      %p95 = scmp.eq.s32.totalorder %s21, 3
      %p96 = por %p94, %p95
      %p98 = scmp.ne.s32.totalorder %s81, %s97
      %p99 = scmp.eq.s32.totalorder %s21, 0
      %p100 = por %p98, %p99
      %s101 = ssub.s32 %s15, %s22
      %p102 = scmp.eq.s32.totalorder %s101, 0
      %s104 = sadd.s32 %s103, 1
      %s105 = scalar_select %p102, %s103, %s104
      %p108 = pneg %p102
      %p109 = scmp.eq.s32.totalorder %s15, 3
      %p110 = por %p108, %p109
      %p111 = scmp.ne.s32.totalorder %s103, %s106
      %p112 = scmp.eq.s32.totalorder %s15, 0
      %p113 = por %p111, %p112
      %p114 = scmp.ne.s32.totalorder %s103, %s106
      %p115 = scmp.eq.s32.totalorder %s20, 3
      %p116 = por %p114, %p115
      %p117 = scmp.ne.s32.totalorder %s106, %s107
      %p118 = scmp.eq.s32.totalorder %s20, 0
      %p119 = por %p117, %p118
      %p120 = scmp.ne.s32.totalorder %s106, %s107
      %p121 = scmp.eq.s32.totalorder %s21, 3
      %p122 = por %p120, %p121
      %p124 = scmp.ne.s32.totalorder %s107, %s123
      %p125 = scmp.eq.s32.totalorder %s21, 0
      %p126 = por %p124, %p125
      %p127 = scmp.le.s32.totalorder 1, %s15
      %p128 = scmp.lt.s32.totalorder %s15, 5
      %p129 = pnand %p127, %p128
      %p130 = pneg %p129
      // Predicated region
      $region9: #{_lambda_.1} parent=5 // pred_check
        _
      $region10: #{_lambda_.1} parent=5 // pred_check_branch
        %132 = sbr.rel (%p129) target = $region12
      $region11: #{_lambda_.1} parent=5 // pred_region
        %s133 = ssub.s32 %s15, 1
      $region12: #{_lambda_.1} parent=5 // pred_fallthru
        _
      %p134 = scmp.lt.s32.totalorder %s15, 4
      // Predicated region
      $region13: #{_lambda_.1} parent=5 // pred_check
        %p135 = pneg %p134
      $region14: #{_lambda_.1} parent=5 // pred_check_branch
        %137 = sbr.rel (%p135) target = $region16
      $region15: #{_lambda_.1} parent=5 // pred_region
        // Predicated region
        $region17: #{_lambda_.1} parent=15 // pred_check
          %p138 = pneg %p35
        $region18: #{_lambda_.1} parent=15 // pred_check_branch
          %140 = sbr.rel (%p138) target = $region20
        $region19: #{_lambda_.1} parent=15 // pred_region
          %p141 = scmp.lt.s32.totalorder %s15, 3
          %s142 = scalar_select %p141, %s15, 3
          %s143 = smul.addr %s142, 8
          %s144 = scalar_lea.vmem %s1, %s143
        $region20: #{_lambda_.1} parent=15 // pred_fallthru
          _
        // Predicated region
        $region21: #{_lambda_.1} parent=15 // pred_check
          %p145 = pneg %p61
        $region22: #{_lambda_.1} parent=15 // pred_check_branch
          %147 = sbr.rel (%p145) target = $region24
        $region23: #{_lambda_.1} parent=15 // pred_region
          %p148 = scmp.lt.s32.totalorder %s15, 3
          %s149 = scalar_select %p148, %s15, 3
          %s150 = smul.addr %s149, 8
          %s151 = scalar_lea.vmem %s2, %s150
        $region24: #{_lambda_.1} parent=15 // pred_fallthru
          _
      $region16: #{_lambda_.1} parent=5 // pred_fallthru
        _
      %p152 = scmp.le.s32.totalorder 1, %s15
      %p153 = scmp.lt.s32.totalorder %s15, 5
      %p154 = pnand %p152, %p153
      %p155 = pneg %p154
      // Predicated region
      $region25: #{_lambda_.1} parent=5 // pred_check
        _
      $region26: #{_lambda_.1} parent=5 // pred_check_branch
        %157 = sbr.rel (%p154) target = $region28
      $region27: #{_lambda_.1} parent=5 // pred_region
        %s158 = ssub.s32 %s15, 1
        %p159 = scmp.lt.s32.totalorder %s20, 3
        %s160 = scalar_select %p159, %s20, 3
        %s161 = smul.addr %s160, 8
        %s162 = scalar_lea.vmem %s1, %s161
        %p163 = pneg %p41
        %p164 = pneg %p38
        %p165 = scmp.lt.s32.totalorder %s20, 3
        %s166 = scalar_select %p165, %s20, 3
        %s167 = smul.addr %s166, 8
        %s168 = scalar_lea.vmem %s2, %s167
        %p169 = pneg %p67
        %p170 = pneg %p64
        %p171 = pneg %p93
        %p172 = pneg %p90
        %s173 = sand.u32 %s80, 1
        %s174 = scalar_lea.sflag [#allocation5], %s173
        %s175 = sand.u32 %s80, 1
        %s176 = smul.addr %s175, 8
        %s177 = scalar_lea.vmem [#allocation4], %s176
        %p178 = pneg %p119
        %p179 = pneg %p116
        %p180 = scmp.lt.s32.totalorder %s20, 3
        %s181 = scalar_select %p180, %s20, 3
        %s182 = smul.addr %s181, 8
        %s183 = scalar_lea.vmem %s4, %s182
        %p184 = scmp.lt.s32.totalorder %s20, 3
        %s185 = scalar_select %p184, %s20, 3
        %s186 = smul.addr %s185, 8
        %s187 = scalar_lea.vmem %s1, %s186
        %p188 = scmp.lt.s32.totalorder %s20, 3
        %s189 = scalar_select %p188, %s20, 3
        %s190 = smul.addr %s189, 8
        %s191 = scalar_lea.vmem %s2, %s190
        %p192 = scmp.lt.s32.totalorder %s20, 3
        %s193 = scalar_select %p192, %s20, 3
        %s194 = smul.addr %s193, 8
        %s195 = scalar_lea.vmem %s4, %s194
        %s196 = smul.u32 %s20, 8
        %s197 = sld [smem:[#allocation3]]
        %s198 = smul.u32 %s197, 668265263
        %s199 = sshra.s32 %s198, 16
        %s200 = sand.u32 %s199, 65535
        %s201 = sxor.u32 %s198, %s200
        %s202 = smul.u32 %s201, 2146121005
        %s203 = sshra.s32 %s202, 15
        %s204 = sand.u32 %s203, 131071
        %s205 = sxor.u32 %s202, %s204
        %s206 = smul.u32 %s205, 2221713035
        %s207 = sshra.s32 %s206, 16
        %s208 = sand.u32 %s207, 65535
        %s209 = sxor.u32 %s206, %s208
        %v210 = vlaneseq
        %v211 = vshrl.u32 %v210, 7
        %v212 = vstv %s196
        %v213 = vadd.s32 %v211, %v212
        %v214 = vlaneseq
        %v215 = vand.u32 %v214, 127
        %s216 = sadd.s32 %s209, 461845907
        %v217 = vmul.u32 %v213, 2654435761
        %v218 = vmul.u32 %v215, 2246822519
        %v219 = vadd.s32 %v217, %v218
        %v220 = vstv %s216
        %v221 = vadd.s32 %v219, %v220
        %v222 = vshra.s32 %v221, 16
        %v223 = vand.u32 %v222, 65535
        %v224 = vxor.u32 %v221, %v223
        %v225 = vmul.u32 %v224, 2146121005
        %v226 = vshra.s32 %v225, 15
        %v227 = vand.u32 %v226, 131071
        %v228 = vxor.u32 %v225, %v227
        %v229 = vmul.u32 %v228, 2221713035
        %v230 = vshra.s32 %v229, 16
        %v231 = vand.u32 %v230, 65535
        %v232 = vxor.u32 %v229, %v231
        %v233 = vand.u32 %v232, 16777215
        %vm234 = vcmp.lt.s32.totalorder %v233, 12582912
        %v235 = vsel %vm234, 1.3333334, 0.0
        %v236 = vld [vmem:[%s187] sm:$0xff]
        %v237 = vmul.f32 %v236, %v235
        %238 = vst [vmem:[%s177] sm:$0xff] %v237
        %v239 = vmul.u32 %v215, 21846
        %v240 = vshra.s32 %v239, 16
        %s241 = sadd.s32 %s209, 3432918353
        %v242 = vmul.u32 %v240, 2246822519
        %v243 = vadd.s32 %v217, %v242
        %v244 = vstv %s241
        %v245 = vadd.s32 %v243, %v244
        %v246 = vshra.s32 %v245, 16
        %v247 = vand.u32 %v246, 65535
        %v248 = vxor.u32 %v245, %v247
        %v249 = vmul.u32 %v248, 2146121005
        %v250 = vshra.s32 %v249, 15
        %v251 = vand.u32 %v250, 131071
        %v252 = vxor.u32 %v249, %v251
        %v253 = vmul.u32 %v252, 2221713035
        %v254 = vshra.s32 %v253, 16
        %v255 = vand.u32 %v254, 65535
        %v256 = vxor.u32 %v253, %v255
        %v257 = vand.u32 %v256, 16777215
        %vm258 = vcmp.lt.s32.totalorder %v257, 12582912
        %v259 = vsel %vm258, 1.3333334, 0.0
        %v260 = vld [vmem:[%s191] sm:$0xff]
        %v261 = vmul.f32 %v260, %v259
        %vm262 = vcmask 392192
        %263 = vst.msk [vmem:[%s195] sm:$0xff] %vm262, %v261
        %s264 = sand.u32 %s80, 1
        %s265 = scalar_lea.sflag [#allocation5], %s264
        %s266 = sand.u32 %s80, 1
        %s267 = smul.addr %s266, 8
        %s268 = scalar_lea.vmem [#allocation4], %s267
        %p269 = scmp.lt.s32.totalorder %s20, 3
        %s270 = scalar_select %p269, %s20, 3
        %s271 = smul.addr %s270, 8
        %s272 = scalar_lea.vmem %s4, %s271
        // Predicated region
        $region29: #{_lambda_.1} parent=27 // pred_check
          %p273 = pneg %p90
        $region30: #{_lambda_.1} parent=27 // pred_check_branch
          %275 = sbr.rel (%p273) target = $region32
        $region31: #{_lambda_.1} parent=27 // pred_region
          %s277 = ssub.s32 128, 128
          %278 = vsyncadd %s265, %s277
          %s279 = smul.addr %s20, 128
          %s280 = scalar_lea.hbm %s3, %s279
          %s282 = sshll.u32 %s268, 4
          %s283 = int_to_ptr.vmem [resolvable:$true] %s282
          %285 = dma.vmem_to_hbm [thread:$0]  %s283, 128, %s280, %s265
        $region32: #{_lambda_.1} parent=27 // pred_fallthru
          _
        // Predicated region
        $region33: #{_lambda_.1} parent=27 // pred_check
          %p286 = pneg %p116
        $region34: #{_lambda_.1} parent=27 // pred_check_branch
          %288 = sbr.rel (%p286) target = $region36
        $region35: #{_lambda_.1} parent=27 // pred_region
          _
        $region36: #{_lambda_.1} parent=27 // pred_fallthru
          _
      $region28: #{_lambda_.1} parent=5 // pred_fallthru
        _
      %p289 = scmp.le.s32.totalorder 2, %s15
      // Predicated region
      $region37: #{_lambda_.1} parent=5 // pred_check
        %p290 = pneg %p289
      $region38: #{_lambda_.1} parent=5 // pred_check_branch
        %292 = sbr.rel (%p290) target = $region40
      $region39: #{_lambda_.1} parent=5 // pred_region
        %s293 = ssub.s32 %s15, 2
        // Predicated region
        $region41: #{_lambda_.1} parent=39 // pred_check
          %p294 = pneg %p96
        $region42: #{_lambda_.1} parent=39 // pred_check_branch
          %296 = sbr.rel (%p294) target = $region44
        $region43: #{_lambda_.1} parent=39 // pred_region
          %s297 = sand.u32 %s81, 1
          %s298 = scalar_lea.sflag [#allocation5], %s297
          %s299 = sand.u32 %s81, 1
          %s300 = smul.addr %s299, 8
          %s301 = scalar_lea.vmem [#allocation4], %s300
          %302 = dma.done %s298, 128
        $region44: #{_lambda_.1} parent=39 // pred_fallthru
          _
        // Predicated region
        $region45: #{_lambda_.1} parent=39 // pred_check
          %p303 = pneg %p122
        $region46: #{_lambda_.1} parent=39 // pred_check_branch
          %305 = sbr.rel (%p303) target = $region48
        $region47: #{_lambda_.1} parent=39 // pred_region
          %p306 = scmp.lt.s32.totalorder %s21, 3
          %s307 = scalar_select %p306, %s21, 3
          %s308 = smul.addr %s307, 8
          %s309 = scalar_lea.vmem %s4, %s308
        $region48: #{_lambda_.1} parent=39 // pred_fallthru
          _
      $region40: #{_lambda_.1} parent=5 // pred_fallthru
        _
    $region6: #{_lambda_.1} parent=1 // loop_footer
      %s19 = sadd.s32 1, %s15
    $region7: #{_lambda_.1} parent=1 // loop_footer_branch
      %14 = sbr.rel target = $region3
    $region8: #{_lambda_.1} parent=1 // loop_exit
      _
    %310 = vsyncpa [#allocation5], 1
    %s311 = scalar_lea.sflag [#allocation5], 1
    %312 = vsyncpa %s311, 1

</llo_original>
